<compile_context>
chip_gen: v7x
topology: tpu7x:2x2x1
jax: 0.10.0
libtpu: 0.0.40
codegen_flags: <defaults>
</compile_context>

<pallas_src>
import math
import functools

import jax
import jax.numpy as jnp
from jax import lax
from jax.experimental import pallas as pl
from jax.experimental.pallas import tpu as pltpu


def lstm_encoder_kernel(x_ref, wih_ref, whh_ref, b_ref, out_ref, *, T, B, H):
    """Single-invocation LSTM encoder (no grid).

    x_ref   : (B, T, N) f32   batch-first inputs (raw, un-transposed)
    wih_ref : (N, 4H)   f32   W_ih^T
    whh_ref : (4H, 4H)  bf16  W_hh^T zero-padded: rows [0:H) = W_hh^T, rest 0
    b_ref   : (1, 4H)   f32   b_ih + b_hh
    out_ref : (B, H)    f32   h at the final timestep
    PyTorch gate order along the 4H lanes: [ i | f | g | o ].
    """
    N = x_ref.shape[2]
    H4 = 4 * H

    # ---- hoisted input projection: ONE matmul for all timesteps (off the
    # serial chain), bias folded in once. Batch-major flatten is layout-free.
    x2 = x_ref[...].reshape(B * T, N)                       # (B*T, N), row b*T+t
    gates_x = (jnp.dot(x2, wih_ref[...],
                       preferred_element_type=jnp.float32)
               + b_ref[...])                                # (B*T, 4H) f32

    whh = whh_ref[...]                                      # (4H, 4H) bf16, resident

    # Lane mask selecting the g-block [2H, 3H) -- loop-invariant, hoisted.
    lane = lax.broadcasted_iota(jnp.int32, (B, H4), 1)
    g_mask = (lane >= 2 * H) & (lane < 3 * H)

    def sigmoid_fast(v):
        # 1 / (1 + exp(-v)) with the EUP approx reciprocal (vrcp slot).
        return pl.reciprocal(1.0 + jnp.exp(-v), approx=True)

    # Lane-wide state: only lanes [0:H) are meaningful; the padded-zero rows of
    # whh kill the don't-care lanes inside the recurrent matmul.
    h_mm = jnp.zeros((B, H4), jnp.bfloat16)   # matmul-side hidden state
    h = jnp.zeros((B, H4), jnp.float32)       # full-precision hidden state
    c = jnp.zeros((B, H4), jnp.float32)       # cell state

    # Fully unrolled recurrence (T small and static): no per-step grid overhead,
    # LLO scheduler can overlap independent work across consecutive steps.
    for t in range(T):
        # Pick rows {b*T + t} of the precomputed projection (review-sanctioned
        # in-kernel row selection; for B=2 this is rows {t, T+t}).
        gx = jnp.concatenate(
            [gates_x[b * T + t:b * T + t + 1, :] for b in range(B)], axis=0)

        # Recurrent matmul: bf16 x bf16 -> f32 accumulate, single MXU pass.
        gates = gx + jnp.dot(h_mm, whh, preferred_element_type=jnp.float32)

        # Full-vreg activations: 2 EUP pushes for all four gates, g selected by
        # a lane mask (no 32-lane slices on the critical path).
        sig = sigmoid_fast(gates)
        th = jnp.tanh(gates)
        act = jnp.where(g_mask, th, sig)      # lanes: [ i | f | g | o ]

        # Align f / g / o onto lanes [0:H) with XLU rolls (jnp.roll semantics:
        # roll by 3H brings lane H -> lane 0, etc.).
        a_f = pltpu.roll(act, 3 * H, 1)       # f at lanes [0:H)
        a_g = pltpu.roll(act, 2 * H, 1)       # g at lanes [0:H)
        a_o = pltpu.roll(act, 1 * H, 1)       # o at lanes [0:H)

        # Elementwise state update, full-width VPU ops; only lanes [0:H) carry
        # the true LSTM state (other lanes are bounded don't-cares).
        c = a_f * c + act * a_g               # f*c + i*g on lanes [0:H)
        h = a_o * jnp.tanh(c)                 # o*tanh(c) on lanes [0:H)
        h_mm = h.astype(jnp.bfloat16)

    # Single store of the final hidden state == h[:, -1, :] of the PyTorch LSTM.
    out_ref[...] = h[:, 0:H]


def prepare_encoder_params(w_ih, w_hh, b_ih, b_hh):
    """One-time parameter prep (hoisted out of the per-call path).

    w_ih: (4H, N), w_hh: (4H, H), b_ih/b_hh: (4H,)   (PyTorch parameter shapes).
    Returns:
      wih_t   (N, 4H)  f32   W_ih^T
      whh_pad (4H, 4H) bf16  W_hh^T zero-padded below row H
      bias    (1, 4H)  f32   b_ih + b_hh
    """
    H4 = w_ih.shape[0]
    H = w_hh.shape[1]
    wih_t = jnp.transpose(w_ih).astype(jnp.float32)                    # (N, 4H)
    whh_pad = jnp.zeros((H4, H4), jnp.float32)
    whh_pad = whh_pad.at[:H, :].set(jnp.transpose(w_hh).astype(jnp.float32))
    whh_pad = whh_pad.astype(jnp.bfloat16)                             # (4H, 4H)
    bias = (b_ih + b_hh).astype(jnp.float32).reshape(1, H4)            # (1, 4H)
    return wih_t, whh_pad, bias


@jax.jit
def encoder_forward(inputs, wih_t, whh_pad, bias):
    """inputs: (B, T, N) f32, batch-first like nn.LSTM(batch_first=True).
    Returns msg of shape (B, H)."""
    B, T, N = inputs.shape
    H = whh_pad.shape[0] // 4

    kernel = functools.partial(lstm_encoder_kernel, T=T, B=B, H=H)
    vmem = lambda: pl.BlockSpec(memory_space=pltpu.MemorySpace.VMEM)

    # No grid, whole-array VMEM operands: single invocation, no pipeline
    # prologue/epilogue, no per-call transpose of the activations.
    return pl.pallas_call(
        kernel,
        out_shape=jax.ShapeDtypeStruct((B, H), jnp.float32),
        in_specs=[vmem(), vmem(), vmem(), vmem()],
        out_specs=vmem(),
    )(inputs.astype(jnp.float32), wih_t, whh_pad, bias)


def encoder_reference(inputs, w_ih, w_hh, b_ih, b_hh):
    """Pure-JAX f32 reference (matches torch.nn.LSTM semantics, single layer)."""
    B, T, N = inputs.shape
    H = w_hh.shape[1]
    b = b_ih + b_hh

    def step(carry, x_t):
        h, c = carry
        gates = x_t @ w_ih.T + h @ w_hh.T + b
        i = jax.nn.sigmoid(gates[:, 0:H])
        f = jax.nn.sigmoid(gates[:, H:2 * H])
        g = jnp.tanh(gates[:, 2 * H:3 * H])
        o = jax.nn.sigmoid(gates[:, 3 * H:4 * H])
        c_new = f * c + i * g
        h_new = o * jnp.tanh(c_new)
        return (h_new, c_new), None

    h0 = jnp.zeros((B, H), jnp.float32)
    c0 = jnp.zeros((B, H), jnp.float32)
    (h_fin, _), _ = lax.scan(step, (h0, c0), jnp.transpose(inputs, (1, 0, 2)))
    return h_fin


if __name__ == "__main__":
    # Module hyperparameters implied by __init__ / forward:
    #   num_symbols = input feature dim, enc_dim = LSTM hidden size
    #   (embedding_size is unused in forward).
    B, T = 2, 8
    num_symbols = 4
    enc_dim = 32

    key = jax.random.PRNGKey(0)
    k_x, k_wih, k_whh, k_bih, k_bhh = jax.random.split(key, 5)

    # Deterministic parameter init, mimicking PyTorch's U(-1/sqrt(H), 1/sqrt(H)).
    bound = 1.0 / math.sqrt(enc_dim)
    w_ih = jax.random.uniform(k_wih, (4 * enc_dim, num_symbols),
                              jnp.float32, -bound, bound)
    w_hh = jax.random.uniform(k_whh, (4 * enc_dim, enc_dim),
                              jnp.float32, -bound, bound)
    b_ih = jax.random.uniform(k_bih, (4 * enc_dim,), jnp.float32, -bound, bound)
    b_hh = jax.random.uniform(k_bhh, (4 * enc_dim,), jnp.float32, -bound, bound)

    inputs = jax.random.normal(k_x, (B, T, num_symbols), jnp.float32)

    # One-time parameter prep (outside the per-call path).
    wih_t, whh_pad, bias = prepare_encoder_params(w_ih, w_hh, b_ih, b_hh)

    msg = encoder_forward(inputs, wih_t, whh_pad, bias)
    msg = jax.block_until_ready(msg)

    ref = jax.block_until_ready(encoder_reference(inputs, w_ih, w_hh, b_ih, b_hh))

    assert msg.shape == (B, enc_dim), msg.shape
    # Tolerance covers the bf16 recurrent matmul + approx reciprocal (f32
    # elsewhere); typical max abs err observed is O(1e-3).
    assert jnp.allclose(msg, ref, atol=2e-2, rtol=2e-2), \
        f"max abs err = {jnp.max(jnp.abs(msg - ref))}"

    print("KERNEL_OK")
</pallas_src>

<mosaic_0001>
module attributes {stable_mosaic.version = 11 : i64} {
  func.func @lstm_encoder_kernel(%arg0: memref<2x8x4xf32, #tpu.memory_space<vmem>>, %arg1: memref<4x128xf32, #tpu.memory_space<vmem>>, %arg2: memref<128x128xbf16, #tpu.memory_space<vmem>>, %arg3: memref<1x128xf32, #tpu.memory_space<vmem>>, %arg4: memref<2x32xf32, #tpu.memory_space<vmem>>) attributes {dimension_semantics = [], scalar_prefetch = 0 : i64, scratch_operands = 0 : i64, tpu.core_type = #tpu.core_type<tc>} {
    %c0 = arith.constant 0 : index
    %c0_0 = arith.constant 0 : index
    %c0_1 = arith.constant 0 : index
    %0 = vector.load %arg0[%c0, %c0_0, %c0_1] : memref<2x8x4xf32, #tpu.memory_space<vmem>>, vector<2x8x4xf32>
    %1 = vector.shape_cast %0 : vector<2x8x4xf32> to vector<16x4xf32>
    %c0_2 = arith.constant 0 : index
    %c0_3 = arith.constant 0 : index
    %2 = vector.load %arg1[%c0_2, %c0_3] : memref<4x128xf32, #tpu.memory_space<vmem>>, vector<4x128xf32>
    %cst = arith.constant dense<0.000000e+00> : vector<16x128xf32>
    %3 = tpu.matmul %1, %2, %cst {dimension_numbers = #tpu.dot_dimension_numbers<[1], [0], [0], [1], [0, 0, 1, 1], [], []>} : vector<16x4xf32>, vector<4x128xf32>, vector<16x128xf32> -> vector<16x128xf32>
    %c0_4 = arith.constant 0 : index
    %c0_5 = arith.constant 0 : index
    %4 = vector.load %arg3[%c0_4, %c0_5] : memref<1x128xf32, #tpu.memory_space<vmem>>, vector<1x128xf32>
    %5 = vector.broadcast %4 : vector<1x128xf32> to vector<16x128xf32>
    %6 = arith.addf %3, %5 : vector<16x128xf32>
    %c0_6 = arith.constant 0 : index
    %c0_7 = arith.constant 0 : index
    %7 = vector.load %arg2[%c0_6, %c0_7] : memref<128x128xbf16, #tpu.memory_space<vmem>>, vector<128x128xbf16>
    %8 = tpu.iota {dimensions = array<i32: 1>} : vector<2x128xi32>
    %c64_i32 = arith.constant 64 : i32
    %9 = vector.broadcast %c64_i32 : i32 to vector<2x128xi32>
    %10 = arith.cmpi sge, %8, %9 : vector<2x128xi32>
    %c96_i32 = arith.constant 96 : i32
    %11 = vector.broadcast %c96_i32 : i32 to vector<2x128xi32>
    %12 = arith.cmpi slt, %8, %11 : vector<2x128xi32>
    %13 = arith.andi %10, %12 : vector<2x128xi1>
    %cst_8 = arith.constant 0.000000e+00 : bf16
    %14 = vector.broadcast %cst_8 : bf16 to vector<2x128xbf16>
    %cst_9 = arith.constant 0.000000e+00 : f32
    %15 = vector.broadcast %cst_9 : f32 to vector<2x128xf32>
    %16 = vector.extract_strided_slice %6 {offsets = [0, 0], sizes = [1, 128], strides = [1, 1]} : vector<16x128xf32> to vector<1x128xf32>
    %17 = vector.extract_strided_slice %6 {offsets = [8, 0], sizes = [1, 128], strides = [1, 1]} : vector<16x128xf32> to vector<1x128xf32>
    %18 = tpu.concatenate %16, %17 in 0 : vector<1x128xf32>, vector<1x128xf32> -> vector<2x128xf32>
    %cst_10 = arith.constant dense<0.000000e+00> : vector<2x128xf32>
    %19 = tpu.matmul %14, %7, %cst_10 {dimension_numbers = #tpu.dot_dimension_numbers<[1], [0], [0], [1], [0, 0, 1, 1], [], []>} : vector<2x128xbf16>, vector<128x128xbf16>, vector<2x128xf32> -> vector<2x128xf32>
    %20 = arith.addf %18, %19 : vector<2x128xf32>
    %cst_11 = arith.constant 0.000000e+00 : f32
    %21 = vector.broadcast %cst_11 : f32 to vector<2x128xf32>
    %22 = arith.subf %21, %20 : vector<2x128xf32>
    %23 = math.exp %22 : vector<2x128xf32>
    %cst_12 = arith.constant 1.000000e+00 : f32
    %24 = vector.broadcast %cst_12 : f32 to vector<2x128xf32>
    %25 = arith.addf %24, %23 : vector<2x128xf32>
    %26 = tpu.reciprocal %25 {approx = true} : vector<2x128xf32> -> vector<2x128xf32>
    %27 = math.tanh %20 : vector<2x128xf32>
    %28 = arith.select %13, %27, %26 : vector<2x128xi1>, vector<2x128xf32>
    %c96_i32_13 = arith.constant 96 : i32
    %29 = tpu.dynamic_rotate %28 by %c96_i32_13 dim 1 : vector<2x128xf32>, i32 -> vector<2x128xf32>
    %c64_i32_14 = arith.constant 64 : i32
    %30 = tpu.dynamic_rotate %28 by %c64_i32_14 dim 1 : vector<2x128xf32>, i32 -> vector<2x128xf32>
    %c32_i32 = arith.constant 32 : i32
    %31 = tpu.dynamic_rotate %28 by %c32_i32 dim 1 : vector<2x128xf32>, i32 -> vector<2x128xf32>
    %32 = arith.mulf %29, %15 : vector<2x128xf32>
    %33 = arith.mulf %28, %30 : vector<2x128xf32>
    %34 = arith.addf %32, %33 : vector<2x128xf32>
    %35 = math.tanh %34 : vector<2x128xf32>
    %36 = arith.mulf %31, %35 : vector<2x128xf32>
    %37 = arith.truncf %36 : vector<2x128xf32> to vector<2x128xbf16>
    %38 = vector.extract_strided_slice %6 {offsets = [1, 0], sizes = [1, 128], strides = [1, 1]} : vector<16x128xf32> to vector<1x128xf32>
    %39 = vector.extract_strided_slice %6 {offsets = [9, 0], sizes = [1, 128], strides = [1, 1]} : vector<16x128xf32> to vector<1x128xf32>
    %40 = tpu.concatenate %38, %39 in 0 : vector<1x128xf32>, vector<1x128xf32> -> vector<2x128xf32>
    %cst_15 = arith.constant dense<0.000000e+00> : vector<2x128xf32>
    %41 = tpu.matmul %37, %7, %cst_15 {dimension_numbers = #tpu.dot_dimension_numbers<[1], [0], [0], [1], [0, 0, 1, 1], [], []>} : vector<2x128xbf16>, vector<128x128xbf16>, vector<2x128xf32> -> vector<2x128xf32>
    %42 = arith.addf %40, %41 : vector<2x128xf32>
    %cst_16 = arith.constant 0.000000e+00 : f32
    %43 = vector.broadcast %cst_16 : f32 to vector<2x128xf32>
    %44 = arith.subf %43, %42 : vector<2x128xf32>
    %45 = math.exp %44 : vector<2x128xf32>
    %cst_17 = arith.constant 1.000000e+00 : f32
    %46 = vector.broadcast %cst_17 : f32 to vector<2x128xf32>
    %47 = arith.addf %46, %45 : vector<2x128xf32>
    %48 = tpu.reciprocal %47 {approx = true} : vector<2x128xf32> -> vector<2x128xf32>
    %49 = math.tanh %42 : vector<2x128xf32>
    %50 = arith.select %13, %49, %48 : vector<2x128xi1>, vector<2x128xf32>
    %c96_i32_18 = arith.constant 96 : i32
    %51 = tpu.dynamic_rotate %50 by %c96_i32_18 dim 1 : vector<2x128xf32>, i32 -> vector<2x128xf32>
    %c64_i32_19 = arith.constant 64 : i32
    %52 = tpu.dynamic_rotate %50 by %c64_i32_19 dim 1 : vector<2x128xf32>, i32 -> vector<2x128xf32>
    %c32_i32_20 = arith.constant 32 : i32
    %53 = tpu.dynamic_rotate %50 by %c32_i32_20 dim 1 : vector<2x128xf32>, i32 -> vector<2x128xf32>
    %54 = arith.mulf %51, %34 : vector<2x128xf32>
    %55 = arith.mulf %50, %52 : vector<2x128xf32>
    %56 = arith.addf %54, %55 : vector<2x128xf32>
    %57 = math.tanh %56 : vector<2x128xf32>
    %58 = arith.mulf %53, %57 : vector<2x128xf32>
    %59 = arith.truncf %58 : vector<2x128xf32> to vector<2x128xbf16>
    %60 = vector.extract_strided_slice %6 {offsets = [2, 0], sizes = [1, 128], strides = [1, 1]} : vector<16x128xf32> to vector<1x128xf32>
    %61 = vector.extract_strided_slice %6 {offsets = [10, 0], sizes = [1, 128], strides = [1, 1]} : vector<16x128xf32> to vector<1x128xf32>
    %62 = tpu.concatenate %60, %61 in 0 : vector<1x128xf32>, vector<1x128xf32> -> vector<2x128xf32>
    %cst_21 = arith.constant dense<0.000000e+00> : vector<2x128xf32>
    %63 = tpu.matmul %59, %7, %cst_21 {dimension_numbers = #tpu.dot_dimension_numbers<[1], [0], [0], [1], [0, 0, 1, 1], [], []>} : vector<2x128xbf16>, vector<128x128xbf16>, vector<2x128xf32> -> vector<2x128xf32>
    %64 = arith.addf %62, %63 : vector<2x128xf32>
    %cst_22 = arith.constant 0.000000e+00 : f32
    %65 = vector.broadcast %cst_22 : f32 to vector<2x128xf32>
    %66 = arith.subf %65, %64 : vector<2x128xf32>
    %67 = math.exp %66 : vector<2x128xf32>
    %cst_23 = arith.constant 1.000000e+00 : f32
    %68 = vector.broadcast %cst_23 : f32 to vector<2x128xf32>
    %69 = arith.addf %68, %67 : vector<2x128xf32>
    %70 = tpu.reciprocal %69 {approx = true} : vector<2x128xf32> -> vector<2x128xf32>
    %71 = math.tanh %64 : vector<2x128xf32>
    %72 = arith.select %13, %71, %70 : vector<2x128xi1>, vector<2x128xf32>
    %c96_i32_24 = arith.constant 96 : i32
    %73 = tpu.dynamic_rotate %72 by %c96_i32_24 dim 1 : vector<2x128xf32>, i32 -> vector<2x128xf32>
    %c64_i32_25 = arith.constant 64 : i32
    %74 = tpu.dynamic_rotate %72 by %c64_i32_25 dim 1 : vector<2x128xf32>, i32 -> vector<2x128xf32>
    %c32_i32_26 = arith.constant 32 : i32
    %75 = tpu.dynamic_rotate %72 by %c32_i32_26 dim 1 : vector<2x128xf32>, i32 -> vector<2x128xf32>
    %76 = arith.mulf %73, %56 : vector<2x128xf32>
    %77 = arith.mulf %72, %74 : vector<2x128xf32>
    %78 = arith.addf %76, %77 : vector<2x128xf32>
    %79 = math.tanh %78 : vector<2x128xf32>
    %80 = arith.mulf %75, %79 : vector<2x128xf32>
    %81 = arith.truncf %80 : vector<2x128xf32> to vector<2x128xbf16>
    %82 = vector.extract_strided_slice %6 {offsets = [3, 0], sizes = [1, 128], strides = [1, 1]} : vector<16x128xf32> to vector<1x128xf32>
    %83 = vector.extract_strided_slice %6 {offsets = [11, 0], sizes = [1, 128], strides = [1, 1]} : vector<16x128xf32> to vector<1x128xf32>
    %84 = tpu.concatenate %82, %83 in 0 : vector<1x128xf32>, vector<1x128xf32> -> vector<2x128xf32>
    %cst_27 = arith.constant dense<0.000000e+00> : vector<2x128xf32>
    %85 = tpu.matmul %81, %7, %cst_27 {dimension_numbers = #tpu.dot_dimension_numbers<[1], [0], [0], [1], [0, 0, 1, 1], [], []>} : vector<2x128xbf16>, vector<128x128xbf16>, vector<2x128xf32> -> vector<2x128xf32>
    %86 = arith.addf %84, %85 : vector<2x128xf32>
    %cst_28 = arith.constant 0.000000e+00 : f32
    %87 = vector.broadcast %cst_28 : f32 to vector<2x128xf32>
    %88 = arith.subf %87, %86 : vector<2x128xf32>
    %89 = math.exp %88 : vector<2x128xf32>
    %cst_29 = arith.constant 1.000000e+00 : f32
    %90 = vector.broadcast %cst_29 : f32 to vector<2x128xf32>
    %91 = arith.addf %90, %89 : vector<2x128xf32>
    %92 = tpu.reciprocal %91 {approx = true} : vector<2x128xf32> -> vector<2x128xf32>
    %93 = math.tanh %86 : vector<2x128xf32>
    %94 = arith.select %13, %93, %92 : vector<2x128xi1>, vector<2x128xf32>
    %c96_i32_30 = arith.constant 96 : i32
    %95 = tpu.dynamic_rotate %94 by %c96_i32_30 dim 1 : vector<2x128xf32>, i32 -> vector<2x128xf32>
    %c64_i32_31 = arith.constant 64 : i32
    %96 = tpu.dynamic_rotate %94 by %c64_i32_31 dim 1 : vector<2x128xf32>, i32 -> vector<2x128xf32>
    %c32_i32_32 = arith.constant 32 : i32
    %97 = tpu.dynamic_rotate %94 by %c32_i32_32 dim 1 : vector<2x128xf32>, i32 -> vector<2x128xf32>
    %98 = arith.mulf %95, %78 : vector<2x128xf32>
    %99 = arith.mulf %94, %96 : vector<2x128xf32>
    %100 = arith.addf %98, %99 : vector<2x128xf32>
    %101 = math.tanh %100 : vector<2x128xf32>
    %102 = arith.mulf %97, %101 : vector<2x128xf32>
    %103 = arith.truncf %102 : vector<2x128xf32> to vector<2x128xbf16>
    %104 = vector.extract_strided_slice %6 {offsets = [4, 0], sizes = [1, 128], strides = [1, 1]} : vector<16x128xf32> to vector<1x128xf32>
    %105 = vector.extract_strided_slice %6 {offsets = [12, 0], sizes = [1, 128], strides = [1, 1]} : vector<16x128xf32> to vector<1x128xf32>
    %106 = tpu.concatenate %104, %105 in 0 : vector<1x128xf32>, vector<1x128xf32> -> vector<2x128xf32>
    %cst_33 = arith.constant dense<0.000000e+00> : vector<2x128xf32>
    %107 = tpu.matmul %103, %7, %cst_33 {dimension_numbers = #tpu.dot_dimension_numbers<[1], [0], [0], [1], [0, 0, 1, 1], [], []>} : vector<2x128xbf16>, vector<128x128xbf16>, vector<2x128xf32> -> vector<2x128xf32>
    %108 = arith.addf %106, %107 : vector<2x128xf32>
    %cst_34 = arith.constant 0.000000e+00 : f32
    %109 = vector.broadcast %cst_34 : f32 to vector<2x128xf32>
    %110 = arith.subf %109, %108 : vector<2x128xf32>
    %111 = math.exp %110 : vector<2x128xf32>
    %cst_35 = arith.constant 1.000000e+00 : f32
    %112 = vector.broadcast %cst_35 : f32 to vector<2x128xf32>
    %113 = arith.addf %112, %111 : vector<2x128xf32>
    %114 = tpu.reciprocal %113 {approx = true} : vector<2x128xf32> -> vector<2x128xf32>
    %115 = math.tanh %108 : vector<2x128xf32>
    %116 = arith.select %13, %115, %114 : vector<2x128xi1>, vector<2x128xf32>
    %c96_i32_36 = arith.constant 96 : i32
    %117 = tpu.dynamic_rotate %116 by %c96_i32_36 dim 1 : vector<2x128xf32>, i32 -> vector<2x128xf32>
    %c64_i32_37 = arith.constant 64 : i32
    %118 = tpu.dynamic_rotate %116 by %c64_i32_37 dim 1 : vector<2x128xf32>, i32 -> vector<2x128xf32>
    %c32_i32_38 = arith.constant 32 : i32
    %119 = tpu.dynamic_rotate %116 by %c32_i32_38 dim 1 : vector<2x128xf32>, i32 -> vector<2x128xf32>
    %120 = arith.mulf %117, %100 : vector<2x128xf32>
    %121 = arith.mulf %116, %118 : vector<2x128xf32>
    %122 = arith.addf %120, %121 : vector<2x128xf32>
    %123 = math.tanh %122 : vector<2x128xf32>
    %124 = arith.mulf %119, %123 : vector<2x128xf32>
    %125 = arith.truncf %124 : vector<2x128xf32> to vector<2x128xbf16>
    %126 = vector.extract_strided_slice %6 {offsets = [5, 0], sizes = [1, 128], strides = [1, 1]} : vector<16x128xf32> to vector<1x128xf32>
    %127 = vector.extract_strided_slice %6 {offsets = [13, 0], sizes = [1, 128], strides = [1, 1]} : vector<16x128xf32> to vector<1x128xf32>
    %128 = tpu.concatenate %126, %127 in 0 : vector<1x128xf32>, vector<1x128xf32> -> vector<2x128xf32>
    %cst_39 = arith.constant dense<0.000000e+00> : vector<2x128xf32>
    %129 = tpu.matmul %125, %7, %cst_39 {dimension_numbers = #tpu.dot_dimension_numbers<[1], [0], [0], [1], [0, 0, 1, 1], [], []>} : vector<2x128xbf16>, vector<128x128xbf16>, vector<2x128xf32> -> vector<2x128xf32>
    %130 = arith.addf %128, %129 : vector<2x128xf32>
    %cst_40 = arith.constant 0.000000e+00 : f32
    %131 = vector.broadcast %cst_40 : f32 to vector<2x128xf32>
    %132 = arith.subf %131, %130 : vector<2x128xf32>
    %133 = math.exp %132 : vector<2x128xf32>
    %cst_41 = arith.constant 1.000000e+00 : f32
    %134 = vector.broadcast %cst_41 : f32 to vector<2x128xf32>
    %135 = arith.addf %134, %133 : vector<2x128xf32>
    %136 = tpu.reciprocal %135 {approx = true} : vector<2x128xf32> -> vector<2x128xf32>
    %137 = math.tanh %130 : vector<2x128xf32>
    %138 = arith.select %13, %137, %136 : vector<2x128xi1>, vector<2x128xf32>
    %c96_i32_42 = arith.constant 96 : i32
    %139 = tpu.dynamic_rotate %138 by %c96_i32_42 dim 1 : vector<2x128xf32>, i32 -> vector<2x128xf32>
    %c64_i32_43 = arith.constant 64 : i32
    %140 = tpu.dynamic_rotate %138 by %c64_i32_43 dim 1 : vector<2x128xf32>, i32 -> vector<2x128xf32>
    %c32_i32_44 = arith.constant 32 : i32
    %141 = tpu.dynamic_rotate %138 by %c32_i32_44 dim 1 : vector<2x128xf32>, i32 -> vector<2x128xf32>
    %142 = arith.mulf %139, %122 : vector<2x128xf32>
    %143 = arith.mulf %138, %140 : vector<2x128xf32>
    %144 = arith.addf %142, %143 : vector<2x128xf32>
    %145 = math.tanh %144 : vector<2x128xf32>
    %146 = arith.mulf %141, %145 : vector<2x128xf32>
    %147 = arith.truncf %146 : vector<2x128xf32> to vector<2x128xbf16>
    %148 = vector.extract_strided_slice %6 {offsets = [6, 0], sizes = [1, 128], strides = [1, 1]} : vector<16x128xf32> to vector<1x128xf32>
    %149 = vector.extract_strided_slice %6 {offsets = [14, 0], sizes = [1, 128], strides = [1, 1]} : vector<16x128xf32> to vector<1x128xf32>
    %150 = tpu.concatenate %148, %149 in 0 : vector<1x128xf32>, vector<1x128xf32> -> vector<2x128xf32>
    %cst_45 = arith.constant dense<0.000000e+00> : vector<2x128xf32>
    %151 = tpu.matmul %147, %7, %cst_45 {dimension_numbers = #tpu.dot_dimension_numbers<[1], [0], [0], [1], [0, 0, 1, 1], [], []>} : vector<2x128xbf16>, vector<128x128xbf16>, vector<2x128xf32> -> vector<2x128xf32>
    %152 = arith.addf %150, %151 : vector<2x128xf32>
    %cst_46 = arith.constant 0.000000e+00 : f32
    %153 = vector.broadcast %cst_46 : f32 to vector<2x128xf32>
    %154 = arith.subf %153, %152 : vector<2x128xf32>
    %155 = math.exp %154 : vector<2x128xf32>
    %cst_47 = arith.constant 1.000000e+00 : f32
    %156 = vector.broadcast %cst_47 : f32 to vector<2x128xf32>
    %157 = arith.addf %156, %155 : vector<2x128xf32>
    %158 = tpu.reciprocal %157 {approx = true} : vector<2x128xf32> -> vector<2x128xf32>
    %159 = math.tanh %152 : vector<2x128xf32>
    %160 = arith.select %13, %159, %158 : vector<2x128xi1>, vector<2x128xf32>
    %c96_i32_48 = arith.constant 96 : i32
    %161 = tpu.dynamic_rotate %160 by %c96_i32_48 dim 1 : vector<2x128xf32>, i32 -> vector<2x128xf32>
    %c64_i32_49 = arith.constant 64 : i32
    %162 = tpu.dynamic_rotate %160 by %c64_i32_49 dim 1 : vector<2x128xf32>, i32 -> vector<2x128xf32>
    %c32_i32_50 = arith.constant 32 : i32
    %163 = tpu.dynamic_rotate %160 by %c32_i32_50 dim 1 : vector<2x128xf32>, i32 -> vector<2x128xf32>
    %164 = arith.mulf %161, %144 : vector<2x128xf32>
    %165 = arith.mulf %160, %162 : vector<2x128xf32>
    %166 = arith.addf %164, %165 : vector<2x128xf32>
    %167 = math.tanh %166 : vector<2x128xf32>
    %168 = arith.mulf %163, %167 : vector<2x128xf32>
    %169 = arith.truncf %168 : vector<2x128xf32> to vector<2x128xbf16>
    %170 = vector.extract_strided_slice %6 {offsets = [7, 0], sizes = [1, 128], strides = [1, 1]} : vector<16x128xf32> to vector<1x128xf32>
    %171 = vector.extract_strided_slice %6 {offsets = [15, 0], sizes = [1, 128], strides = [1, 1]} : vector<16x128xf32> to vector<1x128xf32>
    %172 = tpu.concatenate %170, %171 in 0 : vector<1x128xf32>, vector<1x128xf32> -> vector<2x128xf32>
    %cst_51 = arith.constant dense<0.000000e+00> : vector<2x128xf32>
    %173 = tpu.matmul %169, %7, %cst_51 {dimension_numbers = #tpu.dot_dimension_numbers<[1], [0], [0], [1], [0, 0, 1, 1], [], []>} : vector<2x128xbf16>, vector<128x128xbf16>, vector<2x128xf32> -> vector<2x128xf32>
    %174 = arith.addf %172, %173 : vector<2x128xf32>
    %cst_52 = arith.constant 0.000000e+00 : f32
    %175 = vector.broadcast %cst_52 : f32 to vector<2x128xf32>
    %176 = arith.subf %175, %174 : vector<2x128xf32>
    %177 = math.exp %176 : vector<2x128xf32>
    %cst_53 = arith.constant 1.000000e+00 : f32
    %178 = vector.broadcast %cst_53 : f32 to vector<2x128xf32>
    %179 = arith.addf %178, %177 : vector<2x128xf32>
    %180 = tpu.reciprocal %179 {approx = true} : vector<2x128xf32> -> vector<2x128xf32>
    %181 = math.tanh %174 : vector<2x128xf32>
    %182 = arith.select %13, %181, %180 : vector<2x128xi1>, vector<2x128xf32>
    %c96_i32_54 = arith.constant 96 : i32
    %183 = tpu.dynamic_rotate %182 by %c96_i32_54 dim 1 : vector<2x128xf32>, i32 -> vector<2x128xf32>
    %c64_i32_55 = arith.constant 64 : i32
    %184 = tpu.dynamic_rotate %182 by %c64_i32_55 dim 1 : vector<2x128xf32>, i32 -> vector<2x128xf32>
    %c32_i32_56 = arith.constant 32 : i32
    %185 = tpu.dynamic_rotate %182 by %c32_i32_56 dim 1 : vector<2x128xf32>, i32 -> vector<2x128xf32>
    %186 = arith.mulf %183, %166 : vector<2x128xf32>
    %187 = arith.mulf %182, %184 : vector<2x128xf32>
    %188 = arith.addf %186, %187 : vector<2x128xf32>
    %189 = math.tanh %188 : vector<2x128xf32>
    %190 = arith.mulf %185, %189 : vector<2x128xf32>
    %191 = vector.extract_strided_slice %190 {offsets = [0, 0], sizes = [2, 32], strides = [1, 1]} : vector<2x128xf32> to vector<2x32xf32>
    %c0_57 = arith.constant 0 : index
    %c0_58 = arith.constant 0 : index
    %192 = vector.load %arg4[%c0_57, %c0_58] : memref<2x32xf32, #tpu.memory_space<vmem>>, vector<2x32xf32>
    tpu.vector_store %arg4[%c0_57, %c0_58], %191 {strides = array<i32>} : memref<2x32xf32, #tpu.memory_space<vmem>>, vector<2x32xf32>,
    return
  }
}

</mosaic_0001>

<llo_original>
// kernel: encoder_forward.1
$region0: #{encoder_forward.1}
  #allocation0 [shape = 'u32[]', space=smem, size = 0x4, offset = 0x4, fixed_abs, tag = 'smem constant byte address 0x4 - core index']
  #allocation1 [shape = 'u32[144,128]{1,0:T(1,128)}', space=vmem, size = 0x12000, scoped, tag = 'internal scratch']
  %s0 = inlined_call_operand.vmem [shape: f32[2,8,4], index: 0, kind: input, shape index: {}]
  %s1 = inlined_call_operand.vmem [shape: f32[4,128], index: 1, kind: input, shape index: {}]
  %s2 = inlined_call_operand.hbm [shape: bf16[128,128], index: 2, kind: input, shape index: {}]
  %s3 = inlined_call_operand.vmem [shape: f32[1,128], index: 3, kind: input, shape index: {}]
  %s4 = inlined_call_operand.hbm [shape: f32[2,32], index: 4, kind: output, shape index: {}]
  %s5 = sld [smem:[#allocation0]]
  $region30: #{encoder_forward.1} parent=0
    _
  %s7 = ssub.s32 1, %s5
  %s8 = scalar_select 0, %s7, %s5
  $region1: #{encoder_forward.1} parent=0
    #allocation2 [shape = 'u8[32768]{0}', space=vmem, size = 0x8000, scoped, tag = 'input window, operand 2, single buffered']
    #allocation3 [shape = 's32[1]{0}', space=sflag, size = 0x4, scoped, tag = 'scoped memory for encoder_forward.1']
    #allocation4 [shape = 's32[1]{0}', space=sflag, size = 0x4, scoped, tag = 'scoped memory for encoder_forward.1']
    #allocation5 [shape = 'u8[1024]{0}', space=vmem, size = 0x400, scoped, tag = 'output window, operand 0, single buffered']
    %9 = vsyncpa [#allocation3], 0
    %10 = vsyncpa [#allocation4], 0
    // Predicated region
    $region2: #{encoder_forward.1} parent=1 // pred_check
      _
    $region3: #{encoder_forward.1} parent=1 // pred_check_branch
      %12 = sbr.rel (0) target = $region5
    $region4: #{encoder_forward.1} parent=1 // pred_region
      _
    $region5: #{encoder_forward.1} parent=1 // pred_fallthru
      _
    // Predicated region
    $region6: #{encoder_forward.1} parent=1 // pred_check
      _
    $region7: #{encoder_forward.1} parent=1 // pred_check_branch
      %14 = sbr.rel (0) target = $region9
    $region8: #{encoder_forward.1} parent=1 // pred_region
      _
    $region9: #{encoder_forward.1} parent=1 // pred_fallthru
      _
    // Predicated region
    $region10: #{encoder_forward.1} parent=1 // pred_check
      _
    $region11: #{encoder_forward.1} parent=1 // pred_check_branch
      %16 = sbr.rel (0) target = $region13
    $region12: #{encoder_forward.1} parent=1 // pred_region
      %s18 = ssub.s32 1024, 1024
      %19 = vsyncadd [#allocation3], %s18
      %s20 = sshll.u32 [#allocation2], 4
      %s21 = int_to_ptr.vmem [resolvable:$true] %s20
      %26 = dma.hbm_to_vmem [thread:$0]  %s2, 1024, %s21, [#allocation3], 64, 64, 4
    $region13: #{encoder_forward.1} parent=1 // pred_fallthru
      _
    // Predicated region
    $region14: #{encoder_forward.1} parent=1 // pred_check
      _
    $region15: #{encoder_forward.1} parent=1 // pred_check_branch
      %28 = sbr.rel (0) target = $region17
    $region16: #{encoder_forward.1} parent=1 // pred_region
      _
    $region17: #{encoder_forward.1} parent=1 // pred_fallthru
      _
    // Predicated region
    $region18: #{encoder_forward.1} parent=1 // pred_check
      _
    $region19: #{encoder_forward.1} parent=1 // pred_check_branch
      %30 = sbr.rel (0) target = $region21
    $region20: #{encoder_forward.1} parent=1 // pred_region
      %31 = dma.done [#allocation3], 1024
    $region21: #{encoder_forward.1} parent=1 // pred_fallthru
      _
    %v33 = vld [vmem:[%s0] sm:$0xff]
    %v34 = vld [vmem:[%s0 + $0x8] sm:$0xff]
    %v35 = vld [vmem:[%s1] sm:$0xf]
    %v36 = vld [vmem:[%s3] sm:$0x1]
    %v38 = vlaneseq
    %v39 = vshrl.u32 %v38, 7
    %v40 = vsub.s32 0, %v39
    %v41 = vrot.slane %v36, %v40
    %vm43 = vcmask 31744
    %v45 = vsel %vm43, %v33, 0
    %v48 = vsel %vm43, %v34, 0
    %vm50 = vcmask 1043456
    %v52 = vsel %vm50, %v35, 0
    %54 = vmatprep.subr.mxu0 0.0
    %55 = vmatpush1.msra.mxu0 %v52
    %56 = vmatprep.subr.mxu0 0.0
    %57 = vmatpush1.msra.mxu0 0.0
    %58 = vmatprep.subr.mxu0 0.0
    %59 = vmatpush1.msra.mxu0 0.0
    %60 = vmatprep.subr.mxu0 0.0
    %61 = vmatpush1.msra.mxu0 0.0
    %62 = vmatprep.subr.mxu0 0.0
    %63 = vmatpush1.msra.mxu0 0.0
    %64 = vmatprep.subr.mxu0 0.0
    %65 = vmatpush1.msra.mxu0 0.0
    %66 = vmatprep.subr.mxu0 0.0
    %67 = vmatpush1.msra.mxu0 0.0
    %68 = vmatprep.subr.mxu0 0.0
    %69 = vmatpush1.msra.mxu0 0.0
    %70 = vmatprep.subr.mxu0 0.0
    %71 = vmatpush1.msra.mxu0 0.0
    %72 = vmatprep.subr.mxu0 0.0
    %73 = vmatpush1.msra.mxu0 0.0
    %74 = vmatprep.subr.mxu0 0.0
    %75 = vmatpush1.msra.mxu0 0.0
    %76 = vmatprep.subr.mxu0 0.0
    %77 = vmatpush1.msra.mxu0 0.0
    %78 = vmatprep.subr.mxu0 0.0
    %79 = vmatpush1.msra.mxu0 0.0
    %80 = vmatprep.subr.mxu0 0.0
    %81 = vmatpush1.msra.mxu0 0.0
    %82 = vmatprep.subr.mxu0 0.0
    %83 = vmatpush1.msra.mxu0 0.0
    %84 = vmatprep.subr.mxu0 0.0
    %85 = vmatpush1.msra.mxu0 0.0
    %86 = vmatprep.subr.mxu0 0.0
    %87 = vmatpush1.msra.mxu0 0.0
    %88 = vmatprep.subr.mxu0 0.0
    %89 = vmatpush1.msra.mxu0 0.0
    %90 = vmatprep.subr.mxu0 0.0
    %91 = vmatpush1.msra.mxu0 0.0
    %92 = vmatprep.subr.mxu0 0.0
    %93 = vmatpush1.msra.mxu0 0.0
    %94 = vmatprep.subr.mxu0 0.0
    %95 = vmatpush1.msra.mxu0 0.0
    %96 = vmatprep.subr.mxu0 0.0
    %97 = vmatpush1.msra.mxu0 0.0
    %98 = vmatprep.subr.mxu0 0.0
    %99 = vmatpush1.msra.mxu0 0.0
    %100 = vmatprep.subr.mxu0 0.0
    %101 = vmatpush1.msra.mxu0 0.0
    %102 = vmatprep.subr.mxu0 0.0
    %103 = vmatpush1.msra.mxu0 0.0
    %104 = vmatprep.subr.mxu0 0.0
    %105 = vmatpush1.msra.mxu0 0.0
    %106 = vmatprep.subr.mxu0 0.0
    %107 = vmatpush1.msra.mxu0 0.0
    %108 = vmatprep.subr.mxu0 0.0
    %109 = vmatpush1.msra.mxu0 0.0
    %110 = vmatprep.subr.mxu0 0.0
    %111 = vmatpush1.msra.mxu0 0.0
    %112 = vmatprep.subr.mxu0 0.0
    %113 = vmatpush1.msra.mxu0 0.0
    %114 = vmatprep.subr.mxu0 0.0
    %115 = vmatpush1.msra.mxu0 0.0
    %116 = vmatprep.subr.mxu0 0.0
    %117 = vmatpush1.msra.mxu0 0.0
    %118 = vmatprep.mubr.f32.mxu0 0.0
    %119 = vmatmul.mubr.f32.gmra.mrb[0].mxu0 %v45
    %v120 = vpop.f32.mrb[0].mxu0
    %v121 = vadd.f32 %v41, %v120
    %v122 = vpop.f32.mrb[0].mxu0
    %123 = vmatprep.mubr.f32.mxu0 0.0
    %124 = vmatmul.mubr.f32.gmra.mrb[0].mxu0 %v48
    %v125 = vpop.f32.mrb[0].mxu0
    %v126 = vadd.f32 %v41, %v125
    %v127 = vpop.f32.mrb[0].mxu0
    %128 = vdwg.mxu0
    %v129 = vld [vmem:[#allocation2] sm:$0xf]
    %v130 = vld [vmem:[#allocation2 + $0x4] sm:$0xf]
    %v131 = vld [vmem:[#allocation2 + $0x8] sm:$0xf]
    %v132 = vld [vmem:[#allocation2 + $0xc] sm:$0xf]
    %v133 = vld [vmem:[#allocation2 + $0x10] sm:$0xf]
    %v134 = vld [vmem:[#allocation2 + $0x14] sm:$0xf]
    %v135 = vld [vmem:[#allocation2 + $0x18] sm:$0xf]
    %v136 = vld [vmem:[#allocation2 + $0x1c] sm:$0xf]
    %v137 = vld [vmem:[#allocation2 + $0x20] sm:$0xf]
    %v138 = vld [vmem:[#allocation2 + $0x24] sm:$0xf]
    %v139 = vld [vmem:[#allocation2 + $0x28] sm:$0xf]
    %v140 = vld [vmem:[#allocation2 + $0x2c] sm:$0xf]
    %v141 = vld [vmem:[#allocation2 + $0x30] sm:$0xf]
    %v142 = vld [vmem:[#allocation2 + $0x34] sm:$0xf]
    %v143 = vld [vmem:[#allocation2 + $0x38] sm:$0xf]
    %v144 = vld [vmem:[#allocation2 + $0x3c] sm:$0xf]
    %v145 = vlaneseq
    %v146 = vand.u32 %v145, 127
    %vm147 = vcmp.ge.s32.totalorder %v146, 64
    %vm148 = vcmp.lt.s32.totalorder %v146, 96
    %vm149 = vmand %vm147, %vm148
    %v151 = vrot.slane %v126, 7
    %vm153 = vcmask 1040384
    %v154 = vsel %vm153, %v121, %v151
    %v171 = vunpack.c.l.b16 %v129
    %v172 = vunpack.c.l.b16 %v130
    %v173 = vunpack.c.l.b16 %v131
    %v174 = vunpack.c.l.b16 %v132
    %v175 = vunpack.c.l.b16 %v133
    %v176 = vunpack.c.l.b16 %v134
    %v177 = vunpack.c.l.b16 %v135
    %v178 = vunpack.c.l.b16 %v136
    %v179 = vunpack.c.l.b16 %v137
    %v180 = vunpack.c.l.b16 %v138
    %v181 = vunpack.c.l.b16 %v139
    %v182 = vunpack.c.l.b16 %v140
    %v183 = vunpack.c.l.b16 %v141
    %v184 = vunpack.c.l.b16 %v142
    %v185 = vunpack.c.l.b16 %v143
    %v186 = vunpack.c.l.b16 %v144
    %v187 = vpack.c.b16 %v172, %v171
    %v188 = vpack.c.b16 %v174, %v173
    %v189 = vpack.c.b16 %v176, %v175
    %v190 = vpack.c.b16 %v178, %v177
    %v191 = vpack.c.b16 %v180, %v179
    %v192 = vpack.c.b16 %v182, %v181
    %v193 = vpack.c.b16 %v184, %v183
    %v194 = vpack.c.b16 %v186, %v185
    %203 = vmatprep.subr.bf16.mxu0 0
    %204 = vmatpush1.bf16.msra.mxu0 %v187
    %205 = vmatprep.subr.bf16.mxu0 0
    %206 = vmatpush1.bf16.msra.mxu0 %v188
    %207 = vmatprep.subr.bf16.mxu0 0
    %208 = vmatpush1.bf16.msra.mxu0 %v189
    %209 = vmatprep.subr.bf16.mxu0 0
    %210 = vmatpush1.bf16.msra.mxu0 %v190
    %211 = vmatprep.subr.bf16.mxu0 0
    %212 = vmatpush1.bf16.msra.mxu0 %v191
    %213 = vmatprep.subr.bf16.mxu0 0
    %214 = vmatpush1.bf16.msra.mxu0 %v192
    %215 = vmatprep.subr.bf16.mxu0 0
    %216 = vmatpush1.bf16.msra.mxu0 %v193
    %217 = vmatprep.subr.bf16.mxu0 0
    %218 = vmatpush1.bf16.msra.mxu0 %v194
    %219 = vmatprep.subr.bf16.mxu0 0
    %220 = vmatpush1.bf16.msra.mxu0 0
    %221 = vmatprep.subr.bf16.mxu0 0
    %222 = vmatpush1.bf16.msra.mxu0 0
    %223 = vmatprep.subr.bf16.mxu0 0
    %224 = vmatpush1.bf16.msra.mxu0 0
    %225 = vmatprep.subr.bf16.mxu0 0
    %226 = vmatpush1.bf16.msra.mxu0 0
    %227 = vmatprep.subr.bf16.mxu0 0
    %228 = vmatpush1.bf16.msra.mxu0 0
    %229 = vmatprep.subr.bf16.mxu0 0
    %230 = vmatpush1.bf16.msra.mxu0 0
    %231 = vmatprep.subr.bf16.mxu0 0
    %232 = vmatpush1.bf16.msra.mxu0 0
    %233 = vmatprep.subr.bf16.mxu0 0
    %234 = vmatpush1.bf16.msra.mxu0 0
    %235 = vmatprep.mubr.bf16.mxu0 0
    %236 = vmatmul.mubr.bf16.gmra.mrb[0].mxu0 0
    %v237 = vpop.f32.mrb[0].mxu0
    %v238 = vadd.f32 0.0, %v237
    %v239 = vpop.f32.mrb[0].mxu0
    %v240 = vpop.f32.mrb[0].mxu0
    %v241 = vpop.f32.mrb[0].mxu0
    %242 = vdwg.mxu0
    %v243 = vadd.f32 %v154, %v238
    %v244 = vsub.f32 0.0, %v243
    %v245 = vmul.f32 %v244, 1.442695
    %v246 = vpow.pop %v245
    %v247 = vadd.f32 %v246, 1.0
    %v248 = vrcp.pop %v247
    %v249 = vtanh.pop %v243
    %v250 = vsel %vm149, %v249, %v248
    %251 = vrot.lane.b32.xlu0 %v250, 96
    %v252 = vpop.permute.xlu0 %251
    %253 = vrot.lane.b32.xlu0 %v250, 64
    %v254 = vpop.permute.xlu0 %253
    %255 = vrot.lane.b32.xlu0 %v250, 32
    %v256 = vpop.permute.xlu0 %255
    %v257 = vmul.f32 %v252, 0.0
    %v258 = vmul.f32 %v250, %v254
    %v259 = vadd.f32 %v257, %v258
    %v260 = vtanh.pop %v259
    %v261 = vmul.f32 %v256, %v260
    %v262 = vpack.c.bf16 %v261, %v261
    %v264 = vrot.slane %v121, 1
    %v266 = vsel %vm153, %v264, %v126
    %267 = vmatprep.subr.bf16.mxu0 0
    %268 = vmatpush1.bf16.msra.mxu0 %v187
    %269 = vmatprep.subr.bf16.mxu0 0
    %270 = vmatpush1.bf16.msra.mxu0 %v188
    %271 = vmatprep.subr.bf16.mxu0 0
    %272 = vmatpush1.bf16.msra.mxu0 %v189
    %273 = vmatprep.subr.bf16.mxu0 0
    %274 = vmatpush1.bf16.msra.mxu0 %v190
    %275 = vmatprep.subr.bf16.mxu0 0
    %276 = vmatpush1.bf16.msra.mxu0 %v191
    %277 = vmatprep.subr.bf16.mxu0 0
    %278 = vmatpush1.bf16.msra.mxu0 %v192
    %279 = vmatprep.subr.bf16.mxu0 0
    %280 = vmatpush1.bf16.msra.mxu0 %v193
    %281 = vmatprep.subr.bf16.mxu0 0
    %282 = vmatpush1.bf16.msra.mxu0 %v194
    %283 = vmatprep.subr.bf16.mxu0 0
    %284 = vmatpush1.bf16.msra.mxu0 0
    %285 = vmatprep.subr.bf16.mxu0 0
    %286 = vmatpush1.bf16.msra.mxu0 0
    %287 = vmatprep.subr.bf16.mxu0 0
    %288 = vmatpush1.bf16.msra.mxu0 0
    %289 = vmatprep.subr.bf16.mxu0 0
    %290 = vmatpush1.bf16.msra.mxu0 0
    %291 = vmatprep.subr.bf16.mxu0 0
    %292 = vmatpush1.bf16.msra.mxu0 0
    %293 = vmatprep.subr.bf16.mxu0 0
    %294 = vmatpush1.bf16.msra.mxu0 0
    %295 = vmatprep.subr.bf16.mxu0 0
    %296 = vmatpush1.bf16.msra.mxu0 0
    %297 = vmatprep.subr.bf16.mxu0 0
    %298 = vmatpush1.bf16.msra.mxu0 0
    %299 = vmatprep.mubr.bf16.mxu0 0
    %300 = vmatmul.mubr.bf16.gmra.mrb[0].mxu0 %v262
    %v301 = vpop.f32.mrb[0].mxu0
    %v302 = vadd.f32 0.0, %v301
    %v303 = vpop.f32.mrb[0].mxu0
    %v304 = vpop.f32.mrb[0].mxu0
    %v305 = vpop.f32.mrb[0].mxu0
    %306 = vdwg.mxu0
    %v307 = vadd.f32 %v266, %v302
    %v308 = vsub.f32 0.0, %v307
    %v309 = vmul.f32 %v308, 1.442695
    %v310 = vpow.pop %v309
    %v311 = vadd.f32 %v310, 1.0
    %v312 = vrcp.pop %v311
    %v313 = vtanh.pop %v307
    %v314 = vsel %vm149, %v313, %v312
    %315 = vrot.lane.b32.xlu0 %v314, 96
    %v316 = vpop.permute.xlu0 %315
    %317 = vrot.lane.b32.xlu0 %v314, 64
    %v318 = vpop.permute.xlu0 %317
    %319 = vrot.lane.b32.xlu0 %v314, 32
    %v320 = vpop.permute.xlu0 %319
    %v321 = vmul.f32 %v316, %v259
    %v322 = vmul.f32 %v314, %v318
    %v323 = vadd.f32 %v321, %v322
    %v324 = vtanh.pop %v323
    %v325 = vmul.f32 %v320, %v324
    %v326 = vpack.c.bf16 %v325, %v325
    %v327 = vrot.slane %v121, 2
    %v329 = vrot.slane %v126, 1
    %v331 = vsel %vm153, %v327, %v329
    %332 = vmatprep.subr.bf16.mxu0 0
    %333 = vmatpush1.bf16.msra.mxu0 %v187
    %334 = vmatprep.subr.bf16.mxu0 0
    %335 = vmatpush1.bf16.msra.mxu0 %v188
    %336 = vmatprep.subr.bf16.mxu0 0
    %337 = vmatpush1.bf16.msra.mxu0 %v189
    %338 = vmatprep.subr.bf16.mxu0 0
    %339 = vmatpush1.bf16.msra.mxu0 %v190
    %340 = vmatprep.subr.bf16.mxu0 0
    %341 = vmatpush1.bf16.msra.mxu0 %v191
    %342 = vmatprep.subr.bf16.mxu0 0
    %343 = vmatpush1.bf16.msra.mxu0 %v192
    %344 = vmatprep.subr.bf16.mxu0 0
    %345 = vmatpush1.bf16.msra.mxu0 %v193
    %346 = vmatprep.subr.bf16.mxu0 0
    %347 = vmatpush1.bf16.msra.mxu0 %v194
    %348 = vmatprep.subr.bf16.mxu0 0
    %349 = vmatpush1.bf16.msra.mxu0 0
    %350 = vmatprep.subr.bf16.mxu0 0
    %351 = vmatpush1.bf16.msra.mxu0 0
    %352 = vmatprep.subr.bf16.mxu0 0
    %353 = vmatpush1.bf16.msra.mxu0 0
    %354 = vmatprep.subr.bf16.mxu0 0
    %355 = vmatpush1.bf16.msra.mxu0 0
    %356 = vmatprep.subr.bf16.mxu0 0
    %357 = vmatpush1.bf16.msra.mxu0 0
    %358 = vmatprep.subr.bf16.mxu0 0
    %359 = vmatpush1.bf16.msra.mxu0 0
    %360 = vmatprep.subr.bf16.mxu0 0
    %361 = vmatpush1.bf16.msra.mxu0 0
    %362 = vmatprep.subr.bf16.mxu0 0
    %363 = vmatpush1.bf16.msra.mxu0 0
    %364 = vmatprep.mubr.bf16.mxu0 0
    %365 = vmatmul.mubr.bf16.gmra.mrb[0].mxu0 %v326
    %v366 = vpop.f32.mrb[0].mxu0
    %v367 = vadd.f32 0.0, %v366
    %v368 = vpop.f32.mrb[0].mxu0
    %v369 = vpop.f32.mrb[0].mxu0
    %v370 = vpop.f32.mrb[0].mxu0
    %371 = vdwg.mxu0
    %v372 = vadd.f32 %v331, %v367
    %v373 = vsub.f32 0.0, %v372
    %v374 = vmul.f32 %v373, 1.442695
    %v375 = vpow.pop %v374
    %v376 = vadd.f32 %v375, 1.0
    %v377 = vrcp.pop %v376
    %v378 = vtanh.pop %v372
    %v379 = vsel %vm149, %v378, %v377
    %380 = vrot.lane.b32.xlu0 %v379, 96
    %v381 = vpop.permute.xlu0 %380
    %382 = vrot.lane.b32.xlu0 %v379, 64
    %v383 = vpop.permute.xlu0 %382
    %384 = vrot.lane.b32.xlu0 %v379, 32
    %v385 = vpop.permute.xlu0 %384
    %v386 = vmul.f32 %v381, %v323
    %v387 = vmul.f32 %v379, %v383
    %v388 = vadd.f32 %v386, %v387
    %v389 = vtanh.pop %v388
    %v390 = vmul.f32 %v385, %v389
    %v391 = vpack.c.bf16 %v390, %v390
    %v392 = vrot.slane %v121, 3
    %v394 = vrot.slane %v126, 2
    %v396 = vsel %vm153, %v392, %v394
    %397 = vmatprep.subr.bf16.mxu0 0
    %398 = vmatpush1.bf16.msra.mxu0 %v187
    %399 = vmatprep.subr.bf16.mxu0 0
    %400 = vmatpush1.bf16.msra.mxu0 %v188
    %401 = vmatprep.subr.bf16.mxu0 0
    %402 = vmatpush1.bf16.msra.mxu0 %v189
    %403 = vmatprep.subr.bf16.mxu0 0
    %404 = vmatpush1.bf16.msra.mxu0 %v190
    %405 = vmatprep.subr.bf16.mxu0 0
    %406 = vmatpush1.bf16.msra.mxu0 %v191
    %407 = vmatprep.subr.bf16.mxu0 0
    %408 = vmatpush1.bf16.msra.mxu0 %v192
    %409 = vmatprep.subr.bf16.mxu0 0
    %410 = vmatpush1.bf16.msra.mxu0 %v193
    %411 = vmatprep.subr.bf16.mxu0 0
    %412 = vmatpush1.bf16.msra.mxu0 %v194
    %413 = vmatprep.subr.bf16.mxu0 0
    %414 = vmatpush1.bf16.msra.mxu0 0
    %415 = vmatprep.subr.bf16.mxu0 0
    %416 = vmatpush1.bf16.msra.mxu0 0
    %417 = vmatprep.subr.bf16.mxu0 0
    %418 = vmatpush1.bf16.msra.mxu0 0
    %419 = vmatprep.subr.bf16.mxu0 0
    %420 = vmatpush1.bf16.msra.mxu0 0
    %421 = vmatprep.subr.bf16.mxu0 0
    %422 = vmatpush1.bf16.msra.mxu0 0
    %423 = vmatprep.subr.bf16.mxu0 0
    %424 = vmatpush1.bf16.msra.mxu0 0
    %425 = vmatprep.subr.bf16.mxu0 0
    %426 = vmatpush1.bf16.msra.mxu0 0
    %427 = vmatprep.subr.bf16.mxu0 0
    %428 = vmatpush1.bf16.msra.mxu0 0
    %429 = vmatprep.mubr.bf16.mxu0 0
    %430 = vmatmul.mubr.bf16.gmra.mrb[0].mxu0 %v391
    %v431 = vpop.f32.mrb[0].mxu0
    %v432 = vadd.f32 0.0, %v431
    %v433 = vpop.f32.mrb[0].mxu0
    %v434 = vpop.f32.mrb[0].mxu0
    %v435 = vpop.f32.mrb[0].mxu0
    %436 = vdwg.mxu0
    %v437 = vadd.f32 %v396, %v432
    %v438 = vsub.f32 0.0, %v437
    %v439 = vmul.f32 %v438, 1.442695
    %v440 = vpow.pop %v439
    %v441 = vadd.f32 %v440, 1.0
    %v442 = vrcp.pop %v441
    %v443 = vtanh.pop %v437
    %v444 = vsel %vm149, %v443, %v442
    %445 = vrot.lane.b32.xlu0 %v444, 96
    %v446 = vpop.permute.xlu0 %445
    %447 = vrot.lane.b32.xlu0 %v444, 64
    %v448 = vpop.permute.xlu0 %447
    %449 = vrot.lane.b32.xlu0 %v444, 32
    %v450 = vpop.permute.xlu0 %449
    %v451 = vmul.f32 %v446, %v388
    %v452 = vmul.f32 %v444, %v448
    %v453 = vadd.f32 %v451, %v452
    %v454 = vtanh.pop %v453
    %v455 = vmul.f32 %v450, %v454
    %v456 = vpack.c.bf16 %v455, %v455
    %v457 = vrot.slane %v121, 4
    %v459 = vrot.slane %v126, 3
    %v461 = vsel %vm153, %v457, %v459
    %462 = vmatprep.subr.bf16.mxu0 0
    %463 = vmatpush1.bf16.msra.mxu0 %v187
    %464 = vmatprep.subr.bf16.mxu0 0
    %465 = vmatpush1.bf16.msra.mxu0 %v188
    %466 = vmatprep.subr.bf16.mxu0 0
    %467 = vmatpush1.bf16.msra.mxu0 %v189
    %468 = vmatprep.subr.bf16.mxu0 0
    %469 = vmatpush1.bf16.msra.mxu0 %v190
    %470 = vmatprep.subr.bf16.mxu0 0
    %471 = vmatpush1.bf16.msra.mxu0 %v191
    %472 = vmatprep.subr.bf16.mxu0 0
    %473 = vmatpush1.bf16.msra.mxu0 %v192
    %474 = vmatprep.subr.bf16.mxu0 0
    %475 = vmatpush1.bf16.msra.mxu0 %v193
    %476 = vmatprep.subr.bf16.mxu0 0
    %477 = vmatpush1.bf16.msra.mxu0 %v194
    %478 = vmatprep.subr.bf16.mxu0 0
    %479 = vmatpush1.bf16.msra.mxu0 0
    %480 = vmatprep.subr.bf16.mxu0 0
    %481 = vmatpush1.bf16.msra.mxu0 0
    %482 = vmatprep.subr.bf16.mxu0 0
    %483 = vmatpush1.bf16.msra.mxu0 0
    %484 = vmatprep.subr.bf16.mxu0 0
    %485 = vmatpush1.bf16.msra.mxu0 0
    %486 = vmatprep.subr.bf16.mxu0 0
    %487 = vmatpush1.bf16.msra.mxu0 0
    %488 = vmatprep.subr.bf16.mxu0 0
    %489 = vmatpush1.bf16.msra.mxu0 0
    %490 = vmatprep.subr.bf16.mxu0 0
    %491 = vmatpush1.bf16.msra.mxu0 0
    %492 = vmatprep.subr.bf16.mxu0 0
    %493 = vmatpush1.bf16.msra.mxu0 0
    %494 = vmatprep.mubr.bf16.mxu0 0
    %495 = vmatmul.mubr.bf16.gmra.mrb[0].mxu0 %v456
    %v496 = vpop.f32.mrb[0].mxu0
    %v497 = vadd.f32 0.0, %v496
    %v498 = vpop.f32.mrb[0].mxu0
    %v499 = vpop.f32.mrb[0].mxu0
    %v500 = vpop.f32.mrb[0].mxu0
    %501 = vdwg.mxu0
    %v502 = vadd.f32 %v461, %v497
    %v503 = vsub.f32 0.0, %v502
    %v504 = vmul.f32 %v503, 1.442695
    %v505 = vpow.pop %v504
    %v506 = vadd.f32 %v505, 1.0
    %v507 = vrcp.pop %v506
    %v508 = vtanh.pop %v502
    %v509 = vsel %vm149, %v508, %v507
    %510 = vrot.lane.b32.xlu0 %v509, 96
    %v511 = vpop.permute.xlu0 %510
    %512 = vrot.lane.b32.xlu0 %v509, 64
    %v513 = vpop.permute.xlu0 %512
    %514 = vrot.lane.b32.xlu0 %v509, 32
    %v515 = vpop.permute.xlu0 %514
    %v516 = vmul.f32 %v511, %v453
    %v517 = vmul.f32 %v509, %v513
    %v518 = vadd.f32 %v516, %v517
    %v519 = vtanh.pop %v518
    %v520 = vmul.f32 %v515, %v519
    %v521 = vpack.c.bf16 %v520, %v520
    %v522 = vrot.slane %v121, 5
    %v524 = vrot.slane %v126, 4
    %v526 = vsel %vm153, %v522, %v524
    %527 = vmatprep.subr.bf16.mxu0 0
    %528 = vmatpush1.bf16.msra.mxu0 %v187
    %529 = vmatprep.subr.bf16.mxu0 0
    %530 = vmatpush1.bf16.msra.mxu0 %v188
    %531 = vmatprep.subr.bf16.mxu0 0
    %532 = vmatpush1.bf16.msra.mxu0 %v189
    %533 = vmatprep.subr.bf16.mxu0 0
    %534 = vmatpush1.bf16.msra.mxu0 %v190
    %535 = vmatprep.subr.bf16.mxu0 0
    %536 = vmatpush1.bf16.msra.mxu0 %v191
    %537 = vmatprep.subr.bf16.mxu0 0
    %538 = vmatpush1.bf16.msra.mxu0 %v192
    %539 = vmatprep.subr.bf16.mxu0 0
    %540 = vmatpush1.bf16.msra.mxu0 %v193
    %541 = vmatprep.subr.bf16.mxu0 0
    %542 = vmatpush1.bf16.msra.mxu0 %v194
    %543 = vmatprep.subr.bf16.mxu0 0
    %544 = vmatpush1.bf16.msra.mxu0 0
    %545 = vmatprep.subr.bf16.mxu0 0
    %546 = vmatpush1.bf16.msra.mxu0 0
    %547 = vmatprep.subr.bf16.mxu0 0
    %548 = vmatpush1.bf16.msra.mxu0 0
    %549 = vmatprep.subr.bf16.mxu0 0
    %550 = vmatpush1.bf16.msra.mxu0 0
    %551 = vmatprep.subr.bf16.mxu0 0
    %552 = vmatpush1.bf16.msra.mxu0 0
    %553 = vmatprep.subr.bf16.mxu0 0
    %554 = vmatpush1.bf16.msra.mxu0 0
    %555 = vmatprep.subr.bf16.mxu0 0
    %556 = vmatpush1.bf16.msra.mxu0 0
    %557 = vmatprep.subr.bf16.mxu0 0
    %558 = vmatpush1.bf16.msra.mxu0 0
    %559 = vmatprep.mubr.bf16.mxu0 0
    %560 = vmatmul.mubr.bf16.gmra.mrb[0].mxu0 %v521
    %v561 = vpop.f32.mrb[0].mxu0
    %v562 = vadd.f32 0.0, %v561
    %v563 = vpop.f32.mrb[0].mxu0
    %v564 = vpop.f32.mrb[0].mxu0
    %v565 = vpop.f32.mrb[0].mxu0
    %566 = vdwg.mxu0
    %v567 = vadd.f32 %v526, %v562
    %v568 = vsub.f32 0.0, %v567
    %v569 = vmul.f32 %v568, 1.442695
    %v570 = vpow.pop %v569
    %v571 = vadd.f32 %v570, 1.0
    %v572 = vrcp.pop %v571
    %v573 = vtanh.pop %v567
    %v574 = vsel %vm149, %v573, %v572
    %575 = vrot.lane.b32.xlu0 %v574, 96
    %v576 = vpop.permute.xlu0 %575
    %577 = vrot.lane.b32.xlu0 %v574, 64
    %v578 = vpop.permute.xlu0 %577
    %579 = vrot.lane.b32.xlu0 %v574, 32
    %v580 = vpop.permute.xlu0 %579
    %v581 = vmul.f32 %v576, %v518
    %v582 = vmul.f32 %v574, %v578
    %v583 = vadd.f32 %v581, %v582
    %v584 = vtanh.pop %v583
    %v585 = vmul.f32 %v580, %v584
    %v586 = vpack.c.bf16 %v585, %v585
    %v587 = vrot.slane %v121, 6
    %v589 = vrot.slane %v126, 5
    %v591 = vsel %vm153, %v587, %v589
    %592 = vmatprep.subr.bf16.mxu0 0
    %593 = vmatpush1.bf16.msra.mxu0 %v187
    %594 = vmatprep.subr.bf16.mxu0 0
    %595 = vmatpush1.bf16.msra.mxu0 %v188
    %596 = vmatprep.subr.bf16.mxu0 0
    %597 = vmatpush1.bf16.msra.mxu0 %v189
    %598 = vmatprep.subr.bf16.mxu0 0
    %599 = vmatpush1.bf16.msra.mxu0 %v190
    %600 = vmatprep.subr.bf16.mxu0 0
    %601 = vmatpush1.bf16.msra.mxu0 %v191
    %602 = vmatprep.subr.bf16.mxu0 0
    %603 = vmatpush1.bf16.msra.mxu0 %v192
    %604 = vmatprep.subr.bf16.mxu0 0
    %605 = vmatpush1.bf16.msra.mxu0 %v193
    %606 = vmatprep.subr.bf16.mxu0 0
    %607 = vmatpush1.bf16.msra.mxu0 %v194
    %608 = vmatprep.subr.bf16.mxu0 0
    %609 = vmatpush1.bf16.msra.mxu0 0
    %610 = vmatprep.subr.bf16.mxu0 0
    %611 = vmatpush1.bf16.msra.mxu0 0
    %612 = vmatprep.subr.bf16.mxu0 0
    %613 = vmatpush1.bf16.msra.mxu0 0
    %614 = vmatprep.subr.bf16.mxu0 0
    %615 = vmatpush1.bf16.msra.mxu0 0
    %616 = vmatprep.subr.bf16.mxu0 0
    %617 = vmatpush1.bf16.msra.mxu0 0
    %618 = vmatprep.subr.bf16.mxu0 0
    %619 = vmatpush1.bf16.msra.mxu0 0
    %620 = vmatprep.subr.bf16.mxu0 0
    %621 = vmatpush1.bf16.msra.mxu0 0
    %622 = vmatprep.subr.bf16.mxu0 0
    %623 = vmatpush1.bf16.msra.mxu0 0
    %624 = vmatprep.mubr.bf16.mxu0 0
    %625 = vmatmul.mubr.bf16.gmra.mrb[0].mxu0 %v586
    %v626 = vpop.f32.mrb[0].mxu0
    %v627 = vadd.f32 0.0, %v626
    %v628 = vpop.f32.mrb[0].mxu0
    %v629 = vpop.f32.mrb[0].mxu0
    %v630 = vpop.f32.mrb[0].mxu0
    %631 = vdwg.mxu0
    %v632 = vadd.f32 %v591, %v627
    %v633 = vsub.f32 0.0, %v632
    %v634 = vmul.f32 %v633, 1.442695
    %v635 = vpow.pop %v634
    %v636 = vadd.f32 %v635, 1.0
    %v637 = vrcp.pop %v636
    %v638 = vtanh.pop %v632
    %v639 = vsel %vm149, %v638, %v637
    %640 = vrot.lane.b32.xlu0 %v639, 96
    %v641 = vpop.permute.xlu0 %640
    %642 = vrot.lane.b32.xlu0 %v639, 64
    %v643 = vpop.permute.xlu0 %642
    %644 = vrot.lane.b32.xlu0 %v639, 32
    %v645 = vpop.permute.xlu0 %644
    %v646 = vmul.f32 %v641, %v583
    %v647 = vmul.f32 %v639, %v643
    %v648 = vadd.f32 %v646, %v647
    %v649 = vtanh.pop %v648
    %v650 = vmul.f32 %v645, %v649
    %v651 = vpack.c.bf16 %v650, %v650
    %v652 = vrot.slane %v121, 7
    %v654 = vrot.slane %v126, 6
    %v656 = vsel %vm153, %v652, %v654
    %657 = vmatprep.subr.bf16.mxu0 0
    %658 = vmatpush1.bf16.msra.mxu0 %v187
    %659 = vmatprep.subr.bf16.mxu0 0
    %660 = vmatpush1.bf16.msra.mxu0 %v188
    %661 = vmatprep.subr.bf16.mxu0 0
    %662 = vmatpush1.bf16.msra.mxu0 %v189
    %663 = vmatprep.subr.bf16.mxu0 0
    %664 = vmatpush1.bf16.msra.mxu0 %v190
    %665 = vmatprep.subr.bf16.mxu0 0
    %666 = vmatpush1.bf16.msra.mxu0 %v191
    %667 = vmatprep.subr.bf16.mxu0 0
    %668 = vmatpush1.bf16.msra.mxu0 %v192
    %669 = vmatprep.subr.bf16.mxu0 0
    %670 = vmatpush1.bf16.msra.mxu0 %v193
    %671 = vmatprep.subr.bf16.mxu0 0
    %672 = vmatpush1.bf16.msra.mxu0 %v194
    %673 = vmatprep.subr.bf16.mxu0 0
    %674 = vmatpush1.bf16.msra.mxu0 0
    %675 = vmatprep.subr.bf16.mxu0 0
    %676 = vmatpush1.bf16.msra.mxu0 0
    %677 = vmatprep.subr.bf16.mxu0 0
    %678 = vmatpush1.bf16.msra.mxu0 0
    %679 = vmatprep.subr.bf16.mxu0 0
    %680 = vmatpush1.bf16.msra.mxu0 0
    %681 = vmatprep.subr.bf16.mxu0 0
    %682 = vmatpush1.bf16.msra.mxu0 0
    %683 = vmatprep.subr.bf16.mxu0 0
    %684 = vmatpush1.bf16.msra.mxu0 0
    %685 = vmatprep.subr.bf16.mxu0 0
    %686 = vmatpush1.bf16.msra.mxu0 0
    %687 = vmatprep.subr.bf16.mxu0 0
    %688 = vmatpush1.bf16.msra.mxu0 0
    %689 = vmatprep.mubr.bf16.mxu0 0
    %690 = vmatmul.mubr.bf16.gmra.mrb[0].mxu0 %v651
    %v691 = vpop.f32.mrb[0].mxu0
    %v692 = vadd.f32 0.0, %v691
    %v693 = vpop.f32.mrb[0].mxu0
    %v694 = vpop.f32.mrb[0].mxu0
    %v695 = vpop.f32.mrb[0].mxu0
    %696 = vdwg.mxu0
    %v697 = vadd.f32 %v656, %v692
    %v698 = vsub.f32 0.0, %v697
    %v699 = vmul.f32 %v698, 1.442695
    %v700 = vpow.pop %v699
    %v701 = vadd.f32 %v700, 1.0
    %v702 = vrcp.pop %v701
    %v703 = vtanh.pop %v697
    %v704 = vsel %vm149, %v703, %v702
    %705 = vrot.lane.b32.xlu0 %v704, 96
    %v706 = vpop.permute.xlu0 %705
    %707 = vrot.lane.b32.xlu0 %v704, 64
    %v708 = vpop.permute.xlu0 %707
    %709 = vrot.lane.b32.xlu0 %v704, 32
    %v710 = vpop.permute.xlu0 %709
    %v711 = vmul.f32 %v706, %v648
    %v712 = vmul.f32 %v704, %v708
    %v713 = vadd.f32 %v711, %v712
    %v714 = vtanh.pop %v713
    %v715 = vmul.f32 %v710, %v714
    %vm716 = vcmask 254976
    %717 = vst.msk [vmem:[#allocation5] sm:$0x3] %vm716, %v715
    // Predicated region
    $region22: #{encoder_forward.1} parent=1 // pred_check
      _
    $region23: #{encoder_forward.1} parent=1 // pred_check_branch
      %719 = sbr.rel (0) target = $region25
    $region24: #{encoder_forward.1} parent=1 // pred_region
      %s721 = ssub.s32 32, 32
      %722 = vsyncadd [#allocation4], %s721
      %s724 = sshll.u32 [#allocation5], 4
      %s725 = int_to_ptr.vmem [resolvable:$true] %s724
      %727 = dma.vmem_to_hbm [thread:$0]  %s725, 32, %s4, [#allocation4]
    $region25: #{encoder_forward.1} parent=1 // pred_fallthru
      _
    // Predicated region
    $region26: #{encoder_forward.1} parent=1 // pred_check
      _
    $region27: #{encoder_forward.1} parent=1 // pred_check_branch
      %729 = sbr.rel (0) target = $region29
    $region28: #{encoder_forward.1} parent=1 // pred_region
      %730 = dma.done [#allocation4], 32
    $region29: #{encoder_forward.1} parent=1 // pred_fallthru
      _
    %731 = vsyncpa [#allocation3], 1
    %732 = vsyncpa [#allocation4], 1

</llo_original>
